<compile_context>
chip_gen: v6e
topology: v6e:2x2x1
jax: 0.10.0
libtpu: 0.0.40
codegen_flags: <defaults>
</compile_context>

<pallas_src>
import jax
import jax.numpy as jnp
from jax.experimental import pallas as pl
from jax.experimental.pallas import tpu as pltpu

EPS = 1e-5  # nn.BatchNorm2d default eps


def _bn_relu(acc, s_ref, g_ref, be_ref):
    """Training-mode BN + ReLU on a lane-dense (N*H, W*C) conv output."""
    # s_ref: (W*C, W*C) channel-group selector pre-scaled by 1/(N*H*W), so
    # sum over rows of (acc @ S) is the per-channel mean, broadcast per lane.
    mean = jnp.sum(jnp.dot(acc, s_ref[...], preferred_element_type=jnp.float32),
                   axis=0, keepdims=True)                        # (1, W*C)
    ex2 = jnp.sum(jnp.dot(acc * acc, s_ref[...],
                          preferred_element_type=jnp.float32),
                  axis=0, keepdims=True)                         # (1, W*C)
    var = ex2 - mean * mean                                      # one-pass var
    scale = jax.lax.rsqrt(var + EPS) * g_ref[...]
    shift = be_ref[...] - mean * scale
    return jnp.maximum(acc * scale + shift, 0.0)


def double_conv_kernel(p1_ref, w1_ref, w2_ref, s_ref, shm_ref, shp_ref,
                       g1_ref, be1_ref, g2_ref, be2_ref, o_ref):
    # ---- conv1: one im2col matmul, output directly lane-dense (N*H, W*Cout)
    acc1 = jnp.dot(p1_ref[...], w1_ref[...], preferred_element_type=jnp.float32)
    h1 = _bn_relu(acc1, s_ref, g1_ref, be1_ref)

    # ---- conv2: three h-shifted slabs via boundary-masked shift matrices
    # (kw shift + W padding live in w2_ref's block structure), then one matmul.
    up = jnp.dot(shm_ref[...], h1, preferred_element_type=jnp.float32)  # h-1
    dn = jnp.dot(shp_ref[...], h1, preferred_element_type=jnp.float32)  # h+1
    patches2 = jnp.concatenate([up, h1, dn], axis=-1)          # (N*H, 3*W*C)
    acc2 = jnp.dot(patches2, w2_ref[...], preferred_element_type=jnp.float32)

    o_ref[...] = _bn_relu(acc2, s_ref, g2_ref, be2_ref).astype(o_ref.dtype)


def _fold_weight(w_oihw, W):
    """(Cout, Cin, 3, 3) torch weight -> (3*W*Cin, W*Cout) block matrix.

    Row index = (kh, w, ci), col index = (w', co).  Entry is
    sum_kw [w == w' + (kw-1)] * w[kh, kw, ci, co]; the kw shift and the
    zero padding along W are folded into the block structure."""
    Cout, Cin = int(w_oihw.shape[0]), int(w_oihw.shape[1])
    w = jnp.transpose(w_oihw, (2, 3, 1, 0)).astype(jnp.float32)  # (3,3,Cin,Cout)
    idx = jnp.arange(W)
    blocks = []
    for kh in range(3):
        blk = jnp.zeros((W, Cin, W, Cout), jnp.float32)
        for kw in range(3):
            dw = kw - 1
            e = (idx[:, None] == (idx[None, :] + dw)).astype(jnp.float32)
            blk = blk + e[:, None, :, None] * w[kh, kw][None, :, None, :]
        blocks.append(blk.reshape(W * Cin, W * Cout))
    return jnp.concatenate(blocks, axis=0)                       # (3*W*Cin, W*Cout)


def _row_shift_matrix(N, H, dh):
    """(N*H, N*H) matrix M with (M @ x)[r] = x[r+dh] if 0<=(r%H)+dh<H else 0."""
    R = N * H
    r = jnp.arange(R)
    hit = ((r[:, None] + dh) == r[None, :]).astype(jnp.float32)
    valid = (((r % H) + dh >= 0) & ((r % H) + dh <= H - 1)).astype(jnp.float32)
    return hit * valid[:, None]


def double_conv(x_nchw, params):
    """params = (w1, b1, g1, be1, w2, b2, g2, be2) with PyTorch layouts."""
    w1, b1, g1, be1, w2, b2, g2, be2 = params
    del b1, b2  # conv bias cancels exactly against training-mode BN mean
    N, Cin, H, W = x_nchw.shape
    Cout = int(w1.shape[0])
    R, L = N * H, W * Cout

    # NCHW -> NHWC, pad H only (W padding folded into weight blocks).
    x = jnp.transpose(x_nchw, (0, 2, 3, 1)).astype(jnp.float32)
    xp = jnp.pad(x, ((0, 0), (1, 1), (0, 0), (0, 0)))            # (N, H+2, W, Cin)
    # Lane-dense im2col for conv1: (N*H, 3*W*Cin), kh-major like the weight.
    p1 = jnp.concatenate(
        [xp[:, kh:kh + H].reshape(R, W * Cin) for kh in range(3)], axis=-1)

    w1big = _fold_weight(w1, W)          # (3*W*Cin , W*Cout)
    w2big = _fold_weight(w2, W)          # (3*W*Cout, W*Cout)
    shm = _row_shift_matrix(N, H, -1)    # (R, R) rows h-1 with boundary zeros
    shp = _row_shift_matrix(N, H, +1)    # (R, R) rows h+1 with boundary zeros

    # Channel-group selector (pre-scaled by 1/(N*H*W)): per-channel stats
    # broadcast back to every lane of that channel, all in lane space.
    lane_c = jnp.arange(L) % Cout
    sel = (lane_c[:, None] == lane_c[None, :]).astype(jnp.float32) / (N * H * W)

    lane = lambda v: jnp.tile(v.astype(jnp.float32), W).reshape(1, L)

    vmem = pl.BlockSpec(memory_space=pltpu.MemorySpace.VMEM)
    out = pl.pallas_call(
        double_conv_kernel,
        out_shape=jax.ShapeDtypeStruct((R, L), jnp.float32),
        in_specs=[vmem] * 10,
        out_specs=vmem,
    )(p1, w1big, w2big, sel, shm, shp,
      lane(g1), lane(be1), lane(g2), lane(be2))

    out = out.reshape(N, H, W, Cout)                             # lane-dense -> NHWC
    return jnp.transpose(out, (0, 3, 1, 2))                      # NHWC -> NCHW


def _reference_double_conv(x, params):
    """Pure-JAX reference mirroring the PyTorch module (training-mode BN)."""
    w1, b1, g1, be1, w2, b2, g2, be2 = params

    def block(x, w, b, g, be):
        y = jax.lax.conv_general_dilated(
            x, w, window_strides=(1, 1), padding=((1, 1), (1, 1)),
            dimension_numbers=("NCHW", "OIHW", "NCHW"))
        y = y + b[None, :, None, None]
        m = jnp.mean(y, axis=(0, 2, 3), keepdims=True)
        v = jnp.mean((y - m) ** 2, axis=(0, 2, 3), keepdims=True)
        y = (y - m) * jax.lax.rsqrt(v + EPS) * g[None, :, None, None] \
            + be[None, :, None, None]
        return jnp.maximum(y, 0.0)

    return block(block(x, w1, b1, g1, be1), w2, b2, g2, be2)


if __name__ == "__main__":
    # DoubleConv(in_channels=4, out_channels=8); mid_channels is unused in the
    # reference module's Sequential, so both convs produce out_channels.
    N, Cin, Cout, H, W = 2, 4, 8, 16, 16

    key = jax.random.PRNGKey(0)
    kx, kw1, kb1, kw2, kb2 = jax.random.split(key, 5)
    x = jax.random.normal(kx, (N, Cin, H, W), jnp.float32)

    w1 = jax.random.normal(kw1, (Cout, Cin, 3, 3), jnp.float32) * 0.1
    b1 = jax.random.normal(kb1, (Cout,), jnp.float32) * 0.1
    g1 = jnp.ones((Cout,), jnp.float32)       # BN weight init
    be1 = jnp.zeros((Cout,), jnp.float32)     # BN bias init
    w2 = jax.random.normal(kw2, (Cout, Cout, 3, 3), jnp.float32) * 0.1
    b2 = jax.random.normal(kb2, (Cout,), jnp.float32) * 0.1
    g2 = jnp.ones((Cout,), jnp.float32)
    be2 = jnp.zeros((Cout,), jnp.float32)

    params = (w1, b1, g1, be1, w2, b2, g2, be2)

    out = jax.block_until_ready(double_conv(x, params))
    ref = jax.block_until_ready(_reference_double_conv(x, params))

    assert out.shape == (N, Cout, H, W)
    assert jnp.allclose(out, ref, rtol=1e-3, atol=1e-4), \
        float(jnp.max(jnp.abs(out - ref)))

    print("KERNEL_OK")
</pallas_src>

<mosaic_0001>
module attributes {stable_mosaic.version = 11 : i64} {
  func.func @double_conv_kernel(%arg0: memref<32x192xf32, #tpu.memory_space<vmem>>, %arg1: memref<192x128xf32, #tpu.memory_space<vmem>>, %arg2: memref<384x128xf32, #tpu.memory_space<vmem>>, %arg3: memref<128x128xf32, #tpu.memory_space<vmem>>, %arg4: memref<32x32xf32, #tpu.memory_space<vmem>>, %arg5: memref<32x32xf32, #tpu.memory_space<vmem>>, %arg6: memref<1x128xf32, #tpu.memory_space<vmem>>, %arg7: memref<1x128xf32, #tpu.memory_space<vmem>>, %arg8: memref<1x128xf32, #tpu.memory_space<vmem>>, %arg9: memref<1x128xf32, #tpu.memory_space<vmem>>, %arg10: memref<32x128xf32, #tpu.memory_space<vmem>>) attributes {dimension_semantics = [], scalar_prefetch = 0 : i64, scratch_operands = 0 : i64, tpu.core_type = #tpu.core_type<tc>} {
    %c0 = arith.constant 0 : index
    %c0_0 = arith.constant 0 : index
    %0 = vector.load %arg0[%c0, %c0_0] : memref<32x192xf32, #tpu.memory_space<vmem>>, vector<32x192xf32>
    %c0_1 = arith.constant 0 : index
    %c0_2 = arith.constant 0 : index
    %1 = vector.load %arg1[%c0_1, %c0_2] : memref<192x128xf32, #tpu.memory_space<vmem>>, vector<192x128xf32>
    %cst = arith.constant dense<0.000000e+00> : vector<32x128xf32>
    %2 = tpu.matmul %0, %1, %cst {dimension_numbers = #tpu.dot_dimension_numbers<[1], [0], [0], [1], [0, 0, 1, 1], [], []>} : vector<32x192xf32>, vector<192x128xf32>, vector<32x128xf32> -> vector<32x128xf32>
    %c0_3 = arith.constant 0 : index
    %c0_4 = arith.constant 0 : index
    %3 = vector.load %arg3[%c0_3, %c0_4] : memref<128x128xf32, #tpu.memory_space<vmem>>, vector<128x128xf32>
    %cst_5 = arith.constant dense<0.000000e+00> : vector<32x128xf32>
    %4 = tpu.matmul %2, %3, %cst_5 {dimension_numbers = #tpu.dot_dimension_numbers<[1], [0], [0], [1], [0, 0, 1, 1], [], []>} : vector<32x128xf32>, vector<128x128xf32>, vector<32x128xf32> -> vector<32x128xf32>
    %cst_6 = arith.constant dense<0.000000e+00> : vector<128xf32>
    %5 = vector.multi_reduction <add>, %4, %cst_6 [0] : vector<32x128xf32> to vector<128xf32>
    %6 = vector.shape_cast %5 : vector<128xf32> to vector<1x128xf32>
    %7 = arith.mulf %2, %2 : vector<32x128xf32>
    %c0_7 = arith.constant 0 : index
    %c0_8 = arith.constant 0 : index
    %8 = vector.load %arg3[%c0_7, %c0_8] : memref<128x128xf32, #tpu.memory_space<vmem>>, vector<128x128xf32>
    %cst_9 = arith.constant dense<0.000000e+00> : vector<32x128xf32>
    %9 = tpu.matmul %7, %8, %cst_9 {dimension_numbers = #tpu.dot_dimension_numbers<[1], [0], [0], [1], [0, 0, 1, 1], [], []>} : vector<32x128xf32>, vector<128x128xf32>, vector<32x128xf32> -> vector<32x128xf32>
    %cst_10 = arith.constant dense<0.000000e+00> : vector<128xf32>
    %10 = vector.multi_reduction <add>, %9, %cst_10 [0] : vector<32x128xf32> to vector<128xf32>
    %11 = vector.shape_cast %10 : vector<128xf32> to vector<1x128xf32>
    %12 = arith.mulf %6, %6 : vector<1x128xf32>
    %13 = arith.subf %11, %12 : vector<1x128xf32>
    %cst_11 = arith.constant 9.99999974E-6 : f32
    %14 = vector.broadcast %cst_11 : f32 to vector<1x128xf32>
    %15 = arith.addf %13, %14 : vector<1x128xf32>
    %16 = math.rsqrt %15 : vector<1x128xf32>
    %c0_12 = arith.constant 0 : index
    %c0_13 = arith.constant 0 : index
    %17 = vector.load %arg6[%c0_12, %c0_13] : memref<1x128xf32, #tpu.memory_space<vmem>>, vector<1x128xf32>
    %18 = arith.mulf %16, %17 : vector<1x128xf32>
    %c0_14 = arith.constant 0 : index
    %c0_15 = arith.constant 0 : index
    %19 = vector.load %arg7[%c0_14, %c0_15] : memref<1x128xf32, #tpu.memory_space<vmem>>, vector<1x128xf32>
    %20 = arith.mulf %6, %18 : vector<1x128xf32>
    %21 = arith.subf %19, %20 : vector<1x128xf32>
    %22 = vector.broadcast %18 : vector<1x128xf32> to vector<32x128xf32>
    %23 = arith.mulf %2, %22 : vector<32x128xf32>
    %24 = vector.broadcast %21 : vector<1x128xf32> to vector<32x128xf32>
    %25 = arith.addf %23, %24 : vector<32x128xf32>
    %cst_16 = arith.constant 0.000000e+00 : f32
    %26 = vector.broadcast %cst_16 : f32 to vector<32x128xf32>
    %27 = arith.maximumf %25, %26 : vector<32x128xf32>
    %c0_17 = arith.constant 0 : index
    %c0_18 = arith.constant 0 : index
    %28 = vector.load %arg4[%c0_17, %c0_18] : memref<32x32xf32, #tpu.memory_space<vmem>>, vector<32x32xf32>
    %cst_19 = arith.constant dense<0.000000e+00> : vector<32x128xf32>
    %29 = tpu.matmul %28, %27, %cst_19 {dimension_numbers = #tpu.dot_dimension_numbers<[1], [0], [0], [1], [0, 0, 1, 1], [], []>} : vector<32x32xf32>, vector<32x128xf32>, vector<32x128xf32> -> vector<32x128xf32>
    %c0_20 = arith.constant 0 : index
    %c0_21 = arith.constant 0 : index
    %30 = vector.load %arg5[%c0_20, %c0_21] : memref<32x32xf32, #tpu.memory_space<vmem>>, vector<32x32xf32>
    %cst_22 = arith.constant dense<0.000000e+00> : vector<32x128xf32>
    %31 = tpu.matmul %30, %27, %cst_22 {dimension_numbers = #tpu.dot_dimension_numbers<[1], [0], [0], [1], [0, 0, 1, 1], [], []>} : vector<32x32xf32>, vector<32x128xf32>, vector<32x128xf32> -> vector<32x128xf32>
    %32 = tpu.concatenate %29, %27, %31 in 1 : vector<32x128xf32>, vector<32x128xf32>, vector<32x128xf32> -> vector<32x384xf32>
    %c0_23 = arith.constant 0 : index
    %c0_24 = arith.constant 0 : index
    %33 = vector.load %arg2[%c0_23, %c0_24] : memref<384x128xf32, #tpu.memory_space<vmem>>, vector<384x128xf32>
    %cst_25 = arith.constant dense<0.000000e+00> : vector<32x128xf32>
    %34 = tpu.matmul %32, %33, %cst_25 {dimension_numbers = #tpu.dot_dimension_numbers<[1], [0], [0], [1], [0, 0, 1, 1], [], []>} : vector<32x384xf32>, vector<384x128xf32>, vector<32x128xf32> -> vector<32x128xf32>
    %c0_26 = arith.constant 0 : index
    %c0_27 = arith.constant 0 : index
    %35 = vector.load %arg3[%c0_26, %c0_27] : memref<128x128xf32, #tpu.memory_space<vmem>>, vector<128x128xf32>
    %cst_28 = arith.constant dense<0.000000e+00> : vector<32x128xf32>
    %36 = tpu.matmul %34, %35, %cst_28 {dimension_numbers = #tpu.dot_dimension_numbers<[1], [0], [0], [1], [0, 0, 1, 1], [], []>} : vector<32x128xf32>, vector<128x128xf32>, vector<32x128xf32> -> vector<32x128xf32>
    %cst_29 = arith.constant dense<0.000000e+00> : vector<128xf32>
    %37 = vector.multi_reduction <add>, %36, %cst_29 [0] : vector<32x128xf32> to vector<128xf32>
    %38 = vector.shape_cast %37 : vector<128xf32> to vector<1x128xf32>
    %39 = arith.mulf %34, %34 : vector<32x128xf32>
    %c0_30 = arith.constant 0 : index
    %c0_31 = arith.constant 0 : index
    %40 = vector.load %arg3[%c0_30, %c0_31] : memref<128x128xf32, #tpu.memory_space<vmem>>, vector<128x128xf32>
    %cst_32 = arith.constant dense<0.000000e+00> : vector<32x128xf32>
    %41 = tpu.matmul %39, %40, %cst_32 {dimension_numbers = #tpu.dot_dimension_numbers<[1], [0], [0], [1], [0, 0, 1, 1], [], []>} : vector<32x128xf32>, vector<128x128xf32>, vector<32x128xf32> -> vector<32x128xf32>
    %cst_33 = arith.constant dense<0.000000e+00> : vector<128xf32>
    %42 = vector.multi_reduction <add>, %41, %cst_33 [0] : vector<32x128xf32> to vector<128xf32>
    %43 = vector.shape_cast %42 : vector<128xf32> to vector<1x128xf32>
    %44 = arith.mulf %38, %38 : vector<1x128xf32>
    %45 = arith.subf %43, %44 : vector<1x128xf32>
    %cst_34 = arith.constant 9.99999974E-6 : f32
    %46 = vector.broadcast %cst_34 : f32 to vector<1x128xf32>
    %47 = arith.addf %45, %46 : vector<1x128xf32>
    %48 = math.rsqrt %47 : vector<1x128xf32>
    %c0_35 = arith.constant 0 : index
    %c0_36 = arith.constant 0 : index
    %49 = vector.load %arg8[%c0_35, %c0_36] : memref<1x128xf32, #tpu.memory_space<vmem>>, vector<1x128xf32>
    %50 = arith.mulf %48, %49 : vector<1x128xf32>
    %c0_37 = arith.constant 0 : index
    %c0_38 = arith.constant 0 : index
    %51 = vector.load %arg9[%c0_37, %c0_38] : memref<1x128xf32, #tpu.memory_space<vmem>>, vector<1x128xf32>
    %52 = arith.mulf %38, %50 : vector<1x128xf32>
    %53 = arith.subf %51, %52 : vector<1x128xf32>
    %54 = vector.broadcast %50 : vector<1x128xf32> to vector<32x128xf32>
    %55 = arith.mulf %34, %54 : vector<32x128xf32>
    %56 = vector.broadcast %53 : vector<1x128xf32> to vector<32x128xf32>
    %57 = arith.addf %55, %56 : vector<32x128xf32>
    %cst_39 = arith.constant 0.000000e+00 : f32
    %58 = vector.broadcast %cst_39 : f32 to vector<32x128xf32>
    %59 = arith.maximumf %57, %58 : vector<32x128xf32>
    %c0_40 = arith.constant 0 : index
    %c0_41 = arith.constant 0 : index
    %60 = vector.load %arg10[%c0_40, %c0_41] : memref<32x128xf32, #tpu.memory_space<vmem>>, vector<32x128xf32>
    tpu.vector_store %arg10[%c0_40, %c0_41], %59 {strides = array<i32>} : memref<32x128xf32, #tpu.memory_space<vmem>>, vector<32x128xf32>,
    return
  }
}

</mosaic_0001>

<llo_original>
// kernel: tpu_custom_call.1
$region0: #{tpu_custom_call.1}
  #allocation0 [shape = 'u32[]', space=smem, size = 0x4, offset = 0x4, fixed_abs, tag = 'smem constant byte address 0x4 - core index']
  #allocation1 [shape = 'u32[144,128]{1,0:T(1,128)}', space=vmem, size = 0x12000, scoped, tag = 'internal scratch']
  %s0 = inlined_call_operand.hbm [shape: f32[32,192], index: 0, kind: input, shape index: {}]
  %s1 = inlined_call_operand.hbm [shape: f32[192,128], index: 1, kind: input, shape index: {}]
  %s2 = inlined_call_operand.hbm [shape: f32[384,128], index: 2, kind: input, shape index: {}]
  %s3 = inlined_call_operand.hbm [shape: f32[128,128], index: 3, kind: input, shape index: {}]
  %s4 = inlined_call_operand.hbm [shape: f32[32,32], index: 4, kind: input, shape index: {}]
  %s5 = inlined_call_operand.hbm [shape: f32[32,32], index: 5, kind: input, shape index: {}]
  %s6 = inlined_call_operand.vmem [shape: f32[1,128], index: 6, kind: input, shape index: {}]
  %s7 = inlined_call_operand.vmem [shape: f32[1,128], index: 7, kind: input, shape index: {}]
  %s8 = inlined_call_operand.vmem [shape: f32[1,128], index: 8, kind: input, shape index: {}]
  %s9 = inlined_call_operand.vmem [shape: f32[1,128], index: 9, kind: input, shape index: {}]
  %s10 = inlined_call_operand.hbm [shape: f32[32,128], index: 10, kind: output, shape index: {}]
  %s11 = sld [smem:[#allocation0]]
  $region74: #{tpu_custom_call.1} parent=0
    _
  %s13 = ssub.s32 1, %s11
  %s14 = scalar_select 0, %s13, %s11
  $region1: #{tpu_custom_call.1} parent=0
    #allocation2 [shape = 'u8[32768]{0}', space=vmem, size = 0x8000, scoped, tag = 'input window, operand 0, single buffered']
    #allocation3 [shape = 's32[1]{0}', space=sflag, size = 0x4, scoped, tag = 'scoped memory for tpu_custom_call.1']
    #allocation4 [shape = 's32[1]{0}', space=sflag, size = 0x4, scoped, tag = 'scoped memory for tpu_custom_call.1']
    #allocation5 [shape = 'u8[98304]{0}', space=vmem, size = 0x18000, scoped, tag = 'input window, operand 1, single buffered']
    #allocation6 [shape = 's32[1]{0}', space=sflag, size = 0x4, scoped, tag = 'scoped memory for tpu_custom_call.1']
    #allocation7 [shape = 'u8[196608]{0}', space=vmem, size = 0x30000, scoped, tag = 'input window, operand 2, single buffered']
    #allocation8 [shape = 'u8[65536]{0}', space=vmem, size = 0x10000, scoped, tag = 'input window, operand 3, single buffered']
    #allocation9 [shape = 's32[1]{0}', space=sflag, size = 0x4, scoped, tag = 'scoped memory for tpu_custom_call.1']
    #allocation10 [shape = 'u8[16384]{0}', space=vmem, size = 0x4000, scoped, tag = 'input window, operand 4, single buffered']
    #allocation11 [shape = 'u8[16384]{0}', space=vmem, size = 0x4000, scoped, tag = 'input window, operand 5, single buffered']
    #allocation12 [shape = 's32[1]{0}', space=sflag, size = 0x4, scoped, tag = 'scoped memory for tpu_custom_call.1']
    #allocation13 [shape = 'u8[16384]{0}', space=vmem, size = 0x4000, scoped, tag = 'output window, operand 0, single buffered']
    %15 = vsyncpa [#allocation3], 0
    %16 = vsyncpa [#allocation6], 0
    %17 = vsyncpa [#allocation9], 0
    %18 = vsyncpa [#allocation12], 0
    %19 = vsyncpa [#allocation4], 0
    // Predicated region
    $region2: #{tpu_custom_call.1} parent=1 // pred_check
      _
    $region3: #{tpu_custom_call.1} parent=1 // pred_check_branch
      %21 = sbr.rel (0) target = $region5
    $region4: #{tpu_custom_call.1} parent=1 // pred_region
      %s23 = ssub.s32 1024, 1024
      %24 = vsyncadd [#allocation3], %s23
      %s25 = sshll.u32 [#allocation2], 4
      %s26 = int_to_ptr.vmem [resolvable:$true] %s25
      %31 = dma.hbm_to_vmem [thread:$0]  %s0, 1024, %s26, [#allocation3], 256, 256, 16
    $region5: #{tpu_custom_call.1} parent=1 // pred_fallthru
      _
    // Predicated region
    $region6: #{tpu_custom_call.1} parent=1 // pred_check
      _
    $region7: #{tpu_custom_call.1} parent=1 // pred_check_branch
      %33 = sbr.rel (0) target = $region9
    $region8: #{tpu_custom_call.1} parent=1 // pred_region
      %s35 = ssub.s32 3072, 3072
      %36 = vsyncadd [#allocation6], %s35
      %s37 = sshll.u32 [#allocation5], 4
      %s38 = int_to_ptr.vmem [resolvable:$true] %s37
      %43 = dma.hbm_to_vmem [thread:$0]  %s1, 3072, %s38, [#allocation6], 128, 128, 8
    $region9: #{tpu_custom_call.1} parent=1 // pred_fallthru
      _
    // Predicated region
    $region10: #{tpu_custom_call.1} parent=1 // pred_check
      _
    $region11: #{tpu_custom_call.1} parent=1 // pred_check_branch
      %45 = sbr.rel (0) target = $region13
    $region12: #{tpu_custom_call.1} parent=1 // pred_region
      %s47 = ssub.s32 6144, 6144
      %48 = vsyncadd [#allocation6], %s47
      %s49 = sshll.u32 [#allocation7], 4
      %s50 = int_to_ptr.vmem [resolvable:$true] %s49
      %55 = dma.hbm_to_vmem [thread:$0]  %s2, 6144, %s50, [#allocation6], 128, 128, 8
    $region13: #{tpu_custom_call.1} parent=1 // pred_fallthru
      _
    // Predicated region
    $region14: #{tpu_custom_call.1} parent=1 // pred_check
      _
    $region15: #{tpu_custom_call.1} parent=1 // pred_check_branch
      %57 = sbr.rel (0) target = $region17
    $region16: #{tpu_custom_call.1} parent=1 // pred_region
      %s59 = ssub.s32 2048, 2048
      %60 = vsyncadd [#allocation9], %s59
      %s61 = sshll.u32 [#allocation8], 4
      %s62 = int_to_ptr.vmem [resolvable:$true] %s61
      %67 = dma.hbm_to_vmem [thread:$0]  %s3, 2048, %s62, [#allocation9], 128, 128, 8
    $region17: #{tpu_custom_call.1} parent=1 // pred_fallthru
      _
    // Predicated region
    $region18: #{tpu_custom_call.1} parent=1 // pred_check
      _
    $region19: #{tpu_custom_call.1} parent=1 // pred_check_branch
      %69 = sbr.rel (0) target = $region21
    $region20: #{tpu_custom_call.1} parent=1 // pred_region
      %s71 = ssub.s32 512, 512
      %72 = vsyncadd [#allocation9], %s71
      %s73 = sshll.u32 [#allocation10], 4
      %s74 = int_to_ptr.vmem [resolvable:$true] %s73
      %79 = dma.hbm_to_vmem [thread:$0]  %s4, 512, %s74, [#allocation9], 128, 128, 8
    $region21: #{tpu_custom_call.1} parent=1 // pred_fallthru
      _
    // Predicated region
    $region22: #{tpu_custom_call.1} parent=1 // pred_check
      _
    $region23: #{tpu_custom_call.1} parent=1 // pred_check_branch
      %81 = sbr.rel (0) target = $region25
    $region24: #{tpu_custom_call.1} parent=1 // pred_region
      %s83 = ssub.s32 512, 512
      %84 = vsyncadd [#allocation12], %s83
      %s85 = sshll.u32 [#allocation11], 4
      %s86 = int_to_ptr.vmem [resolvable:$true] %s85
      %91 = dma.hbm_to_vmem [thread:$0]  %s5, 512, %s86, [#allocation12], 128, 128, 8
    $region25: #{tpu_custom_call.1} parent=1 // pred_fallthru
      _
    // Predicated region
    $region26: #{tpu_custom_call.1} parent=1 // pred_check
      _
    $region27: #{tpu_custom_call.1} parent=1 // pred_check_branch
      %93 = sbr.rel (0) target = $region29
    $region28: #{tpu_custom_call.1} parent=1 // pred_region
      _
    $region29: #{tpu_custom_call.1} parent=1 // pred_fallthru
      _
    // Predicated region
    $region30: #{tpu_custom_call.1} parent=1 // pred_check
      _
    $region31: #{tpu_custom_call.1} parent=1 // pred_check_branch
      %95 = sbr.rel (0) target = $region33
    $region32: #{tpu_custom_call.1} parent=1 // pred_region
      _
    $region33: #{tpu_custom_call.1} parent=1 // pred_fallthru
      _
    // Predicated region
    $region34: #{tpu_custom_call.1} parent=1 // pred_check
      _
    $region35: #{tpu_custom_call.1} parent=1 // pred_check_branch
      %97 = sbr.rel (0) target = $region37
    $region36: #{tpu_custom_call.1} parent=1 // pred_region
      _
    $region37: #{tpu_custom_call.1} parent=1 // pred_fallthru
      _
    // Predicated region
    $region38: #{tpu_custom_call.1} parent=1 // pred_check
      _
    $region39: #{tpu_custom_call.1} parent=1 // pred_check_branch
      %99 = sbr.rel (0) target = $region41
    $region40: #{tpu_custom_call.1} parent=1 // pred_region
      _
    $region41: #{tpu_custom_call.1} parent=1 // pred_fallthru
      _
    // Predicated region
    $region42: #{tpu_custom_call.1} parent=1 // pred_check
      _
    $region43: #{tpu_custom_call.1} parent=1 // pred_check_branch
      %101 = sbr.rel (0) target = $region45
    $region44: #{tpu_custom_call.1} parent=1 // pred_region
      %102 = dma.done [#allocation3], 1024
    $region45: #{tpu_custom_call.1} parent=1 // pred_fallthru
      _
    // Predicated region
    $region46: #{tpu_custom_call.1} parent=1 // pred_check
      _
    $region47: #{tpu_custom_call.1} parent=1 // pred_check_branch
      %104 = sbr.rel (0) target = $region49
    $region48: #{tpu_custom_call.1} parent=1 // pred_region
      %105 = dma.done [#allocation6], 3072
    $region49: #{tpu_custom_call.1} parent=1 // pred_fallthru
      _
    // Predicated region
    $region50: #{tpu_custom_call.1} parent=1 // pred_check
      _
    $region51: #{tpu_custom_call.1} parent=1 // pred_check_branch
      %107 = sbr.rel (0) target = $region53
    $region52: #{tpu_custom_call.1} parent=1 // pred_region
      %108 = dma.done [#allocation6], 6144
    $region53: #{tpu_custom_call.1} parent=1 // pred_fallthru
      _
    // Predicated region
    $region54: #{tpu_custom_call.1} parent=1 // pred_check
      _
    $region55: #{tpu_custom_call.1} parent=1 // pred_check_branch
      %110 = sbr.rel (0) target = $region57
    $region56: #{tpu_custom_call.1} parent=1 // pred_region
      %111 = dma.done [#allocation9], 2048
    $region57: #{tpu_custom_call.1} parent=1 // pred_fallthru
      _
    // Predicated region
    $region58: #{tpu_custom_call.1} parent=1 // pred_check
      _
    $region59: #{tpu_custom_call.1} parent=1 // pred_check_branch
      %113 = sbr.rel (0) target = $region61
    $region60: #{tpu_custom_call.1} parent=1 // pred_region
      %114 = dma.done [#allocation9], 512
    $region61: #{tpu_custom_call.1} parent=1 // pred_fallthru
      _
    // Predicated region
    $region62: #{tpu_custom_call.1} parent=1 // pred_check
      _
    $region63: #{tpu_custom_call.1} parent=1 // pred_check_branch
      %116 = sbr.rel (0) target = $region65
    $region64: #{tpu_custom_call.1} parent=1 // pred_region
      %117 = dma.done [#allocation12], 512
    $region65: #{tpu_custom_call.1} parent=1 // pred_fallthru
      _
    %v118 = vld [vmem:[#allocation2] sm:$0xff]
    %v119 = vld [vmem:[#allocation2 + $0x8] sm:$0xff]
    %v120 = vld [vmem:[#allocation2 + $0x10] sm:$0xff]
    %v121 = vld [vmem:[#allocation2 + $0x18] sm:$0xff]
    %v122 = vld [vmem:[#allocation2 + $0x20] sm:$0xff]
    %v123 = vld [vmem:[#allocation2 + $0x28] sm:$0xff]
    %v124 = vld [vmem:[#allocation2 + $0x30] sm:$0xff]
    %v125 = vld [vmem:[#allocation2 + $0x38] sm:$0xff]
    %v126 = vld [vmem:[#allocation5] sm:$0xff]
    %v127 = vld [vmem:[#allocation5 + $0x8] sm:$0xff]
    %v128 = vld [vmem:[#allocation5 + $0x10] sm:$0xff]
    %v129 = vld [vmem:[#allocation5 + $0x18] sm:$0xff]
    %v130 = vld [vmem:[#allocation5 + $0x20] sm:$0xff]
    %v131 = vld [vmem:[#allocation5 + $0x28] sm:$0xff]
    %v132 = vld [vmem:[#allocation5 + $0x30] sm:$0xff]
    %v133 = vld [vmem:[#allocation5 + $0x38] sm:$0xff]
    %v134 = vld [vmem:[#allocation5 + $0x40] sm:$0xff]
    %v135 = vld [vmem:[#allocation5 + $0x48] sm:$0xff]
    %v136 = vld [vmem:[#allocation5 + $0x50] sm:$0xff]
    %v137 = vld [vmem:[#allocation5 + $0x58] sm:$0xff]
    %v138 = vld [vmem:[#allocation5 + $0x60] sm:$0xff]
    %v139 = vld [vmem:[#allocation5 + $0x68] sm:$0xff]
    %v140 = vld [vmem:[#allocation5 + $0x70] sm:$0xff]
    %v141 = vld [vmem:[#allocation5 + $0x78] sm:$0xff]
    %v142 = vld [vmem:[#allocation5 + $0x80] sm:$0xff]
    %v143 = vld [vmem:[#allocation5 + $0x88] sm:$0xff]
    %v144 = vld [vmem:[#allocation5 + $0x90] sm:$0xff]
    %v145 = vld [vmem:[#allocation5 + $0x98] sm:$0xff]
    %v146 = vld [vmem:[#allocation5 + $0xa0] sm:$0xff]
    %v147 = vld [vmem:[#allocation5 + $0xa8] sm:$0xff]
    %v148 = vld [vmem:[#allocation5 + $0xb0] sm:$0xff]
    %v149 = vld [vmem:[#allocation5 + $0xb8] sm:$0xff]
    %vm150 = vcmask 523264
    %v152 = vsel %vm150, %v119, 0
    %v155 = vsel %vm150, %v121, 0
    %v158 = vsel %vm150, %v123, 0
    %v161 = vsel %vm150, %v125, 0
    %163 = vmatprep.subr.mxu0 0.0
    %164 = vmatpush1.msra.mxu0 %v141
    %165 = vmatprep.subr.mxu0 0.0
    %166 = vmatpush1.msra.mxu0 %v140
    %167 = vmatprep.subr.mxu0 0.0
    %168 = vmatpush1.msra.mxu0 %v139
    %169 = vmatprep.subr.mxu0 0.0
    %170 = vmatpush1.msra.mxu0 %v138
    %171 = vmatprep.subr.mxu0 0.0
    %172 = vmatpush1.msra.mxu0 %v137
    %173 = vmatprep.subr.mxu0 0.0
    %174 = vmatpush1.msra.mxu0 %v136
    %175 = vmatprep.subr.mxu0 0.0
    %176 = vmatpush1.msra.mxu0 %v135
    %177 = vmatprep.subr.mxu0 0.0
    %178 = vmatpush1.msra.mxu0 %v134
    %179 = vmatprep.subr.mxu0 0.0
    %180 = vmatpush1.msra.mxu0 %v133
    %181 = vmatprep.subr.mxu0 0.0
    %182 = vmatpush1.msra.mxu0 %v132
    %183 = vmatprep.subr.mxu0 0.0
    %184 = vmatpush1.msra.mxu0 %v131
    %185 = vmatprep.subr.mxu0 0.0
    %186 = vmatpush1.msra.mxu0 %v130
    %187 = vmatprep.subr.mxu0 0.0
    %188 = vmatpush1.msra.mxu0 %v129
    %189 = vmatprep.subr.mxu0 0.0
    %190 = vmatpush1.msra.mxu0 %v128
    %191 = vmatprep.subr.mxu0 0.0
    %192 = vmatpush1.msra.mxu0 %v127
    %193 = vmatprep.subr.mxu0 0.0
    %194 = vmatpush1.msra.mxu0 %v126
    %195 = vmatprep.subr.mxu0 0.0
    %196 = vmatpush2.msra.mxu0 0.0
    %197 = vmatprep.subr.mxu0 0.0
    %198 = vmatpush2.msra.mxu0 0.0
    %199 = vmatprep.subr.mxu0 0.0
    %200 = vmatpush2.msra.mxu0 0.0
    %201 = vmatprep.subr.mxu0 0.0
    %202 = vmatpush2.msra.mxu0 0.0
    %203 = vmatprep.subr.mxu0 0.0
    %204 = vmatpush2.msra.mxu0 0.0
    %205 = vmatprep.subr.mxu0 0.0
    %206 = vmatpush2.msra.mxu0 0.0
    %207 = vmatprep.subr.mxu0 0.0
    %208 = vmatpush2.msra.mxu0 0.0
    %209 = vmatprep.subr.mxu0 0.0
    %210 = vmatpush2.msra.mxu0 0.0
    %211 = vmatprep.subr.mxu0 0.0
    %212 = vmatpush2.msra.mxu0 %v149
    %213 = vmatprep.subr.mxu0 0.0
    %214 = vmatpush2.msra.mxu0 %v148
    %215 = vmatprep.subr.mxu0 0.0
    %216 = vmatpush2.msra.mxu0 %v147
    %217 = vmatprep.subr.mxu0 0.0
    %218 = vmatpush2.msra.mxu0 %v146
    %219 = vmatprep.subr.mxu0 0.0
    %220 = vmatpush2.msra.mxu0 %v145
    %221 = vmatprep.subr.mxu0 0.0
    %222 = vmatpush2.msra.mxu0 %v144
    %223 = vmatprep.subr.mxu0 0.0
    %224 = vmatpush2.msra.mxu0 %v143
    %225 = vmatprep.subr.mxu0 0.0
    %226 = vmatpush2.msra.mxu0 %v142
    %227 = vmatprep.mubr.f32.mxu0 %v152
    %228 = vmatmul.mubr.f32.gmra.mxu0 %v118
    %v229 = vpop.f32.mrf.mxu0
    %v230 = vadd.f32 0.0, %v229
    %v231 = vpop.f32.mrf.mxu0
    %232 = vmatprep.mubr.f32.mxu0 %v155
    %233 = vmatmul.mubr.f32.gmra.mxu0 %v120
    %v234 = vpop.f32.mrf.mxu0
    %v235 = vadd.f32 0.0, %v234
    %v236 = vpop.f32.mrf.mxu0
    %237 = vmatprep.mubr.f32.mxu0 %v158
    %238 = vmatmul.mubr.f32.gmra.mxu0 %v122
    %v239 = vpop.f32.mrf.mxu0
    %v240 = vadd.f32 0.0, %v239
    %v241 = vpop.f32.mrf.mxu0
    %242 = vmatprep.mubr.f32.mxu0 %v161
    %243 = vmatmul.mubr.f32.gmra.mxu0 %v124
    %v244 = vpop.f32.mrf.mxu0
    %v245 = vadd.f32 0.0, %v244
    %v246 = vpop.f32.mrf.mxu0
    %247 = vdwg.mxu0
    %v248 = vld [vmem:[#allocation8] sm:$0xff]
    %v249 = vld [vmem:[#allocation8 + $0x8] sm:$0xff]
    %v250 = vld [vmem:[#allocation8 + $0x10] sm:$0xff]
    %v251 = vld [vmem:[#allocation8 + $0x18] sm:$0xff]
    %v252 = vld [vmem:[#allocation8 + $0x20] sm:$0xff]
    %v253 = vld [vmem:[#allocation8 + $0x28] sm:$0xff]
    %v254 = vld [vmem:[#allocation8 + $0x30] sm:$0xff]
    %v255 = vld [vmem:[#allocation8 + $0x38] sm:$0xff]
    %v256 = vld [vmem:[#allocation8 + $0x40] sm:$0xff]
    %v257 = vld [vmem:[#allocation8 + $0x48] sm:$0xff]
    %v258 = vld [vmem:[#allocation8 + $0x50] sm:$0xff]
    %v259 = vld [vmem:[#allocation8 + $0x58] sm:$0xff]
    %v260 = vld [vmem:[#allocation8 + $0x60] sm:$0xff]
    %v261 = vld [vmem:[#allocation8 + $0x68] sm:$0xff]
    %v262 = vld [vmem:[#allocation8 + $0x70] sm:$0xff]
    %v263 = vld [vmem:[#allocation8 + $0x78] sm:$0xff]
    %264 = vmatprep.subr.mxu0 0.0
    %265 = vmatpush1.msra.mxu0 %v263
    %266 = vmatprep.subr.mxu0 0.0
    %267 = vmatpush1.msra.mxu0 %v262
    %268 = vmatprep.subr.mxu0 0.0
    %269 = vmatpush1.msra.mxu0 %v261
    %270 = vmatprep.subr.mxu0 0.0
    %271 = vmatpush1.msra.mxu0 %v260
    %272 = vmatprep.subr.mxu0 0.0
    %273 = vmatpush1.msra.mxu0 %v259
    %274 = vmatprep.subr.mxu0 0.0
    %275 = vmatpush1.msra.mxu0 %v258
    %276 = vmatprep.subr.mxu0 0.0
    %277 = vmatpush1.msra.mxu0 %v257
    %278 = vmatprep.subr.mxu0 0.0
    %279 = vmatpush1.msra.mxu0 %v256
    %280 = vmatprep.subr.mxu0 0.0
    %281 = vmatpush1.msra.mxu0 %v255
    %282 = vmatprep.subr.mxu0 0.0
    %283 = vmatpush1.msra.mxu0 %v254
    %284 = vmatprep.subr.mxu0 0.0
    %285 = vmatpush1.msra.mxu0 %v253
    %286 = vmatprep.subr.mxu0 0.0
    %287 = vmatpush1.msra.mxu0 %v252
    %288 = vmatprep.subr.mxu0 0.0
    %289 = vmatpush1.msra.mxu0 %v251
    %290 = vmatprep.subr.mxu0 0.0
    %291 = vmatpush1.msra.mxu0 %v250
    %292 = vmatprep.subr.mxu0 0.0
    %293 = vmatpush1.msra.mxu0 %v249
    %294 = vmatprep.subr.mxu0 0.0
    %295 = vmatpush1.msra.mxu0 %v248
    %296 = vmatprep.subr.mxu0 0.0
    %297 = vmatpush2.msra.mxu0 0.0
    %298 = vmatprep.subr.mxu0 0.0
    %299 = vmatpush2.msra.mxu0 0.0
    %300 = vmatprep.subr.mxu0 0.0
    %301 = vmatpush2.msra.mxu0 0.0
    %302 = vmatprep.subr.mxu0 0.0
    %303 = vmatpush2.msra.mxu0 0.0
    %304 = vmatprep.subr.mxu0 0.0
    %305 = vmatpush2.msra.mxu0 0.0
    %306 = vmatprep.subr.mxu0 0.0
    %307 = vmatpush2.msra.mxu0 0.0
    %308 = vmatprep.subr.mxu0 0.0
    %309 = vmatpush2.msra.mxu0 0.0
    %310 = vmatprep.subr.mxu0 0.0
    %311 = vmatpush2.msra.mxu0 0.0
    %312 = vmatprep.subr.mxu0 0.0
    %313 = vmatpush2.msra.mxu0 0.0
    %314 = vmatprep.subr.mxu0 0.0
    %315 = vmatpush2.msra.mxu0 0.0
    %316 = vmatprep.subr.mxu0 0.0
    %317 = vmatpush2.msra.mxu0 0.0
    %318 = vmatprep.subr.mxu0 0.0
    %319 = vmatpush2.msra.mxu0 0.0
    %320 = vmatprep.subr.mxu0 0.0
    %321 = vmatpush2.msra.mxu0 0.0
    %322 = vmatprep.subr.mxu0 0.0
    %323 = vmatpush2.msra.mxu0 0.0
    %324 = vmatprep.subr.mxu0 0.0
    %325 = vmatpush2.msra.mxu0 0.0
    %326 = vmatprep.subr.mxu0 0.0
    %327 = vmatpush2.msra.mxu0 0.0
    %328 = vmatprep.mubr.f32.mxu0 0.0
    %329 = vmatmul.mubr.f32.gmra.mxu0 %v230
    %v330 = vpop.f32.mrf.mxu0
    %v331 = vadd.f32 0.0, %v330
    %v332 = vpop.f32.mrf.mxu0
    %333 = vmatprep.mubr.f32.mxu0 0.0
    %334 = vmatmul.mubr.f32.gmra.mxu0 %v235
    %v335 = vpop.f32.mrf.mxu0
    %v336 = vadd.f32 0.0, %v335
    %v337 = vpop.f32.mrf.mxu0
    %338 = vmatprep.mubr.f32.mxu0 0.0
    %339 = vmatmul.mubr.f32.gmra.mxu0 %v240
    %v340 = vpop.f32.mrf.mxu0
    %v341 = vadd.f32 0.0, %v340
    %v342 = vpop.f32.mrf.mxu0
    %343 = vmatprep.mubr.f32.mxu0 0.0
    %344 = vmatmul.mubr.f32.gmra.mxu0 %v245
    %v345 = vpop.f32.mrf.mxu0
    %v346 = vadd.f32 0.0, %v345
    %v347 = vpop.f32.mrf.mxu0
    %348 = vdwg.mxu0
    %v349 = vadd.f32 %v331, %v336
    %v350 = vadd.f32 %v349, %v341
    %v351 = vadd.f32 %v350, %v346
    %v352 = vrot.slane %v351, 4
    %v353 = vadd.f32 %v351, %v352
    %v354 = vrot.slane %v353, 2
    %v355 = vadd.f32 %v353, %v354
    %v356 = vrot.slane %v355, 1
    %v357 = vadd.f32 %v355, %v356
    %v358 = vmul.f32 %v230, %v230
    %v359 = vmul.f32 %v235, %v235
    %v360 = vmul.f32 %v240, %v240
    %v361 = vmul.f32 %v245, %v245
    %362 = vmatprep.subr.mxu0 0.0
    %363 = vmatpush1.msra.mxu0 %v263
    %364 = vmatprep.subr.mxu0 0.0
    %365 = vmatpush1.msra.mxu0 %v262
    %366 = vmatprep.subr.mxu0 0.0
    %367 = vmatpush1.msra.mxu0 %v261
    %368 = vmatprep.subr.mxu0 0.0
    %369 = vmatpush1.msra.mxu0 %v260
    %370 = vmatprep.subr.mxu0 0.0
    %371 = vmatpush1.msra.mxu0 %v259
    %372 = vmatprep.subr.mxu0 0.0
    %373 = vmatpush1.msra.mxu0 %v258
    %374 = vmatprep.subr.mxu0 0.0
    %375 = vmatpush1.msra.mxu0 %v257
    %376 = vmatprep.subr.mxu0 0.0
    %377 = vmatpush1.msra.mxu0 %v256
    %378 = vmatprep.subr.mxu0 0.0
    %379 = vmatpush1.msra.mxu0 %v255
    %380 = vmatprep.subr.mxu0 0.0
    %381 = vmatpush1.msra.mxu0 %v254
    %382 = vmatprep.subr.mxu0 0.0
    %383 = vmatpush1.msra.mxu0 %v253
    %384 = vmatprep.subr.mxu0 0.0
    %385 = vmatpush1.msra.mxu0 %v252
    %386 = vmatprep.subr.mxu0 0.0
    %387 = vmatpush1.msra.mxu0 %v251
    %388 = vmatprep.subr.mxu0 0.0
    %389 = vmatpush1.msra.mxu0 %v250
    %390 = vmatprep.subr.mxu0 0.0
    %391 = vmatpush1.msra.mxu0 %v249
    %392 = vmatprep.subr.mxu0 0.0
    %393 = vmatpush1.msra.mxu0 %v248
    %394 = vmatprep.subr.mxu0 0.0
    %395 = vmatpush2.msra.mxu0 0.0
    %396 = vmatprep.subr.mxu0 0.0
    %397 = vmatpush2.msra.mxu0 0.0
    %398 = vmatprep.subr.mxu0 0.0
    %399 = vmatpush2.msra.mxu0 0.0
    %400 = vmatprep.subr.mxu0 0.0
    %401 = vmatpush2.msra.mxu0 0.0
    %402 = vmatprep.subr.mxu0 0.0
    %403 = vmatpush2.msra.mxu0 0.0
    %404 = vmatprep.subr.mxu0 0.0
    %405 = vmatpush2.msra.mxu0 0.0
    %406 = vmatprep.subr.mxu0 0.0
    %407 = vmatpush2.msra.mxu0 0.0
    %408 = vmatprep.subr.mxu0 0.0
    %409 = vmatpush2.msra.mxu0 0.0
    %410 = vmatprep.subr.mxu0 0.0
    %411 = vmatpush2.msra.mxu0 0.0
    %412 = vmatprep.subr.mxu0 0.0
    %413 = vmatpush2.msra.mxu0 0.0
    %414 = vmatprep.subr.mxu0 0.0
    %415 = vmatpush2.msra.mxu0 0.0
    %416 = vmatprep.subr.mxu0 0.0
    %417 = vmatpush2.msra.mxu0 0.0
    %418 = vmatprep.subr.mxu0 0.0
    %419 = vmatpush2.msra.mxu0 0.0
    %420 = vmatprep.subr.mxu0 0.0
    %421 = vmatpush2.msra.mxu0 0.0
    %422 = vmatprep.subr.mxu0 0.0
    %423 = vmatpush2.msra.mxu0 0.0
    %424 = vmatprep.subr.mxu0 0.0
    %425 = vmatpush2.msra.mxu0 0.0
    %426 = vmatprep.mubr.f32.mxu0 0.0
    %427 = vmatmul.mubr.f32.gmra.mxu0 %v358
    %v428 = vpop.f32.mrf.mxu0
    %v429 = vadd.f32 0.0, %v428
    %v430 = vpop.f32.mrf.mxu0
    %431 = vmatprep.mubr.f32.mxu0 0.0
    %432 = vmatmul.mubr.f32.gmra.mxu0 %v359
    %v433 = vpop.f32.mrf.mxu0
    %v434 = vadd.f32 0.0, %v433
    %v435 = vpop.f32.mrf.mxu0
    %436 = vmatprep.mubr.f32.mxu0 0.0
    %437 = vmatmul.mubr.f32.gmra.mxu0 %v360
    %v438 = vpop.f32.mrf.mxu0
    %v439 = vadd.f32 0.0, %v438
    %v440 = vpop.f32.mrf.mxu0
    %441 = vmatprep.mubr.f32.mxu0 0.0
    %442 = vmatmul.mubr.f32.gmra.mxu0 %v361
    %v443 = vpop.f32.mrf.mxu0
    %v444 = vadd.f32 0.0, %v443
    %v445 = vpop.f32.mrf.mxu0
    %446 = vdwg.mxu0
    %v447 = vadd.f32 %v429, %v434
    %v448 = vadd.f32 %v447, %v439
    %v449 = vadd.f32 %v448, %v444
    %v450 = vrot.slane %v449, 4
    %v451 = vadd.f32 %v449, %v450
    %v452 = vrot.slane %v451, 2
    %v453 = vadd.f32 %v451, %v452
    %v454 = vrot.slane %v453, 1
    %v455 = vadd.f32 %v453, %v454
    %v456 = vmul.f32 %v357, %v357
    %v457 = vsub.f32 %v455, %v456
    %v458 = vadd.f32 %v457, 1e-05
    %v459 = vrsqrt.pop %v458
    %v460 = vld [vmem:[%s6] sm:$0x1]
    %v461 = vmul.f32 %v459, %v460
    %v462 = vld [vmem:[%s7] sm:$0x1]
    %v463 = vmul.f32 %v357, %v461
    %v464 = vsub.f32 %v462, %v463
    %v465 = vlaneseq
    %v466 = vshrl.u32 %v465, 7
    %v467 = vsub.s32 0, %v466
    %v468 = vrot.slane %v461, %v467
    %v469 = vmul.f32 %v230, %v468
    %v470 = vmul.f32 %v235, %v468
    %v471 = vmul.f32 %v240, %v468
    %v472 = vmul.f32 %v245, %v468
    %v474 = vlaneseq
    %v475 = vshrl.u32 %v474, 7
    %v476 = vsub.s32 0, %v475
    %v477 = vrot.slane %v464, %v476
    %v479 = vadd.f32 %v469, %v477
    %v480 = vadd.f32 %v470, %v477
    %v481 = vadd.f32 %v471, %v477
    %v482 = vadd.f32 %v472, %v477
    %v483 = vmax.f32 %v479, 0.0
    %v484 = vmax.f32 %v480, 0.0
    %v485 = vmax.f32 %v481, 0.0
    %v486 = vmax.f32 %v482, 0.0
    %v487 = vld [vmem:[#allocation10] sm:$0xff]
    %v488 = vld [vmem:[#allocation10 + $0x8] sm:$0xff]
    %v489 = vld [vmem:[#allocation10 + $0x10] sm:$0xff]
    %v490 = vld [vmem:[#allocation10 + $0x18] sm:$0xff]
    %vm491 = vcmask 261120
    %v493 = vsel %vm491, %v487, 0
    %v496 = vsel %vm491, %v488, 0
    %v499 = vsel %vm491, %v489, 0
    %v502 = vsel %vm491, %v490, 0
    %504 = vmatprep.subr.mxu0 0.0
    %505 = vmatpush1.msra.mxu0 0.0
    %506 = vmatprep.subr.mxu0 0.0
    %507 = vmatpush1.msra.mxu0 0.0
    %508 = vmatprep.subr.mxu0 0.0
    %509 = vmatpush1.msra.mxu0 0.0
    %510 = vmatprep.subr.mxu0 0.0
    %511 = vmatpush1.msra.mxu0 0.0
    %512 = vmatprep.subr.mxu0 0.0
    %513 = vmatpush1.msra.mxu0 0.0
    %514 = vmatprep.subr.mxu0 0.0
    %515 = vmatpush1.msra.mxu0 0.0
    %516 = vmatprep.subr.mxu0 0.0
    %517 = vmatpush1.msra.mxu0 0.0
    %518 = vmatprep.subr.mxu0 0.0
    %519 = vmatpush1.msra.mxu0 0.0
    %520 = vmatprep.subr.mxu0 0.0
    %521 = vmatpush1.msra.mxu0 0.0
    %522 = vmatprep.subr.mxu0 0.0
    %523 = vmatpush1.msra.mxu0 0.0
    %524 = vmatprep.subr.mxu0 0.0
    %525 = vmatpush1.msra.mxu0 0.0
    %526 = vmatprep.subr.mxu0 0.0
    %527 = vmatpush1.msra.mxu0 0.0
    %528 = vmatprep.subr.mxu0 0.0
    %529 = vmatpush1.msra.mxu0 %v486
    %530 = vmatprep.subr.mxu0 0.0
    %531 = vmatpush1.msra.mxu0 %v485
    %532 = vmatprep.subr.mxu0 0.0
    %533 = vmatpush1.msra.mxu0 %v484
    %534 = vmatprep.subr.mxu0 0.0
    %535 = vmatpush1.msra.mxu0 %v483
    %536 = vmatprep.subr.mxu0 0.0
    %537 = vmatpush2.msra.mxu0 0.0
    %538 = vmatprep.subr.mxu0 0.0
    %539 = vmatpush2.msra.mxu0 0.0
    %540 = vmatprep.subr.mxu0 0.0
    %541 = vmatpush2.msra.mxu0 0.0
    %542 = vmatprep.subr.mxu0 0.0
    %543 = vmatpush2.msra.mxu0 0.0
    %544 = vmatprep.subr.mxu0 0.0
    %545 = vmatpush2.msra.mxu0 0.0
    %546 = vmatprep.subr.mxu0 0.0
    %547 = vmatpush2.msra.mxu0 0.0
    %548 = vmatprep.subr.mxu0 0.0
    %549 = vmatpush2.msra.mxu0 0.0
    %550 = vmatprep.subr.mxu0 0.0
    %551 = vmatpush2.msra.mxu0 0.0
    %552 = vmatprep.subr.mxu0 0.0
    %553 = vmatpush2.msra.mxu0 0.0
    %554 = vmatprep.subr.mxu0 0.0
    %555 = vmatpush2.msra.mxu0 0.0
    %556 = vmatprep.subr.mxu0 0.0
    %557 = vmatpush2.msra.mxu0 0.0
    %558 = vmatprep.subr.mxu0 0.0
    %559 = vmatpush2.msra.mxu0 0.0
    %560 = vmatprep.subr.mxu0 0.0
    %561 = vmatpush2.msra.mxu0 0.0
    %562 = vmatprep.subr.mxu0 0.0
    %563 = vmatpush2.msra.mxu0 0.0
    %564 = vmatprep.subr.mxu0 0.0
    %565 = vmatpush2.msra.mxu0 0.0
    %566 = vmatprep.subr.mxu0 0.0
    %567 = vmatpush2.msra.mxu0 0.0
    %568 = vmatprep.mubr.f32.mxu0 0.0
    %569 = vmatmul.mubr.f32.gmra.mxu0 %v493
    %v570 = vpop.f32.mrf.mxu0
    %v571 = vadd.f32 0.0, %v570
    %v572 = vpop.f32.mrf.mxu0
    %573 = vmatprep.mubr.f32.mxu0 0.0
    %574 = vmatmul.mubr.f32.gmra.mxu0 %v496
    %v575 = vpop.f32.mrf.mxu0
    %v576 = vadd.f32 0.0, %v575
    %v577 = vpop.f32.mrf.mxu0
    %578 = vmatprep.mubr.f32.mxu0 0.0
    %579 = vmatmul.mubr.f32.gmra.mxu0 %v499
    %v580 = vpop.f32.mrf.mxu0
    %v581 = vadd.f32 0.0, %v580
    %v582 = vpop.f32.mrf.mxu0
    %583 = vmatprep.mubr.f32.mxu0 0.0
    %584 = vmatmul.mubr.f32.gmra.mxu0 %v502
    %v585 = vpop.f32.mrf.mxu0
    %v586 = vadd.f32 0.0, %v585
    %v587 = vpop.f32.mrf.mxu0
    %588 = vdwg.mxu0
    %v589 = vld [vmem:[#allocation11] sm:$0xff]
    %v590 = vld [vmem:[#allocation11 + $0x8] sm:$0xff]
    %v591 = vld [vmem:[#allocation11 + $0x10] sm:$0xff]
    %v592 = vld [vmem:[#allocation11 + $0x18] sm:$0xff]
    %v594 = vsel %vm491, %v589, 0
    %v597 = vsel %vm491, %v590, 0
    %v600 = vsel %vm491, %v591, 0
    %v603 = vsel %vm491, %v592, 0
    %605 = vmatprep.subr.mxu0 0.0
    %606 = vmatpush1.msra.mxu0 0.0
    %607 = vmatprep.subr.mxu0 0.0
    %608 = vmatpush1.msra.mxu0 0.0
    %609 = vmatprep.subr.mxu0 0.0
    %610 = vmatpush1.msra.mxu0 0.0
    %611 = vmatprep.subr.mxu0 0.0
    %612 = vmatpush1.msra.mxu0 0.0
    %613 = vmatprep.subr.mxu0 0.0
    %614 = vmatpush1.msra.mxu0 0.0
    %615 = vmatprep.subr.mxu0 0.0
    %616 = vmatpush1.msra.mxu0 0.0
    %617 = vmatprep.subr.mxu0 0.0
    %618 = vmatpush1.msra.mxu0 0.0
    %619 = vmatprep.subr.mxu0 0.0
    %620 = vmatpush1.msra.mxu0 0.0
    %621 = vmatprep.subr.mxu0 0.0
    %622 = vmatpush1.msra.mxu0 0.0
    %623 = vmatprep.subr.mxu0 0.0
    %624 = vmatpush1.msra.mxu0 0.0
    %625 = vmatprep.subr.mxu0 0.0
    %626 = vmatpush1.msra.mxu0 0.0
    %627 = vmatprep.subr.mxu0 0.0
    %628 = vmatpush1.msra.mxu0 0.0
    %629 = vmatprep.subr.mxu0 0.0
    %630 = vmatpush1.msra.mxu0 %v486
    %631 = vmatprep.subr.mxu0 0.0
    %632 = vmatpush1.msra.mxu0 %v485
    %633 = vmatprep.subr.mxu0 0.0
    %634 = vmatpush1.msra.mxu0 %v484
    %635 = vmatprep.subr.mxu0 0.0
    %636 = vmatpush1.msra.mxu0 %v483
    %637 = vmatprep.subr.mxu0 0.0
    %638 = vmatpush2.msra.mxu0 0.0
    %639 = vmatprep.subr.mxu0 0.0
    %640 = vmatpush2.msra.mxu0 0.0
    %641 = vmatprep.subr.mxu0 0.0
    %642 = vmatpush2.msra.mxu0 0.0
    %643 = vmatprep.subr.mxu0 0.0
    %644 = vmatpush2.msra.mxu0 0.0
    %645 = vmatprep.subr.mxu0 0.0
    %646 = vmatpush2.msra.mxu0 0.0
    %647 = vmatprep.subr.mxu0 0.0
    %648 = vmatpush2.msra.mxu0 0.0
    %649 = vmatprep.subr.mxu0 0.0
    %650 = vmatpush2.msra.mxu0 0.0
    %651 = vmatprep.subr.mxu0 0.0
    %652 = vmatpush2.msra.mxu0 0.0
    %653 = vmatprep.subr.mxu0 0.0
    %654 = vmatpush2.msra.mxu0 0.0
    %655 = vmatprep.subr.mxu0 0.0
    %656 = vmatpush2.msra.mxu0 0.0
    %657 = vmatprep.subr.mxu0 0.0
    %658 = vmatpush2.msra.mxu0 0.0
    %659 = vmatprep.subr.mxu0 0.0
    %660 = vmatpush2.msra.mxu0 0.0
    %661 = vmatprep.subr.mxu0 0.0
    %662 = vmatpush2.msra.mxu0 0.0
    %663 = vmatprep.subr.mxu0 0.0
    %664 = vmatpush2.msra.mxu0 0.0
    %665 = vmatprep.subr.mxu0 0.0
    %666 = vmatpush2.msra.mxu0 0.0
    %667 = vmatprep.subr.mxu0 0.0
    %668 = vmatpush2.msra.mxu0 0.0
    %669 = vmatprep.mubr.f32.mxu0 0.0
    %670 = vmatmul.mubr.f32.gmra.mxu0 %v594
    %v671 = vpop.f32.mrf.mxu0
    %v672 = vadd.f32 0.0, %v671
    %v673 = vpop.f32.mrf.mxu0
    %674 = vmatprep.mubr.f32.mxu0 0.0
    %675 = vmatmul.mubr.f32.gmra.mxu0 %v597
    %v676 = vpop.f32.mrf.mxu0
    %v677 = vadd.f32 0.0, %v676
    %v678 = vpop.f32.mrf.mxu0
    %679 = vmatprep.mubr.f32.mxu0 0.0
    %680 = vmatmul.mubr.f32.gmra.mxu0 %v600
    %v681 = vpop.f32.mrf.mxu0
    %v682 = vadd.f32 0.0, %v681
    %v683 = vpop.f32.mrf.mxu0
    %684 = vmatprep.mubr.f32.mxu0 0.0
    %685 = vmatmul.mubr.f32.gmra.mxu0 %v603
    %v686 = vpop.f32.mrf.mxu0
    %v687 = vadd.f32 0.0, %v686
    %v688 = vpop.f32.mrf.mxu0
    %689 = vdwg.mxu0
    %v690 = vld [vmem:[#allocation7] sm:$0xff]
    %v691 = vld [vmem:[#allocation7 + $0x8] sm:$0xff]
    %v692 = vld [vmem:[#allocation7 + $0x10] sm:$0xff]
    %v693 = vld [vmem:[#allocation7 + $0x18] sm:$0xff]
    %v694 = vld [vmem:[#allocation7 + $0x20] sm:$0xff]
    %v695 = vld [vmem:[#allocation7 + $0x28] sm:$0xff]
    %v696 = vld [vmem:[#allocation7 + $0x30] sm:$0xff]
    %v697 = vld [vmem:[#allocation7 + $0x38] sm:$0xff]
    %v698 = vld [vmem:[#allocation7 + $0x40] sm:$0xff]
    %v699 = vld [vmem:[#allocation7 + $0x48] sm:$0xff]
    %v700 = vld [vmem:[#allocation7 + $0x50] sm:$0xff]
    %v701 = vld [vmem:[#allocation7 + $0x58] sm:$0xff]
    %v702 = vld [vmem:[#allocation7 + $0x60] sm:$0xff]
    %v703 = vld [vmem:[#allocation7 + $0x68] sm:$0xff]
    %v704 = vld [vmem:[#allocation7 + $0x70] sm:$0xff]
    %v705 = vld [vmem:[#allocation7 + $0x78] sm:$0xff]
    %v706 = vld [vmem:[#allocation7 + $0x80] sm:$0xff]
    %v707 = vld [vmem:[#allocation7 + $0x88] sm:$0xff]
    %v708 = vld [vmem:[#allocation7 + $0x90] sm:$0xff]
    %v709 = vld [vmem:[#allocation7 + $0x98] sm:$0xff]
    %v710 = vld [vmem:[#allocation7 + $0xa0] sm:$0xff]
    %v711 = vld [vmem:[#allocation7 + $0xa8] sm:$0xff]
    %v712 = vld [vmem:[#allocation7 + $0xb0] sm:$0xff]
    %v713 = vld [vmem:[#allocation7 + $0xb8] sm:$0xff]
    %v714 = vld [vmem:[#allocation7 + $0xc0] sm:$0xff]
    %v715 = vld [vmem:[#allocation7 + $0xc8] sm:$0xff]
    %v716 = vld [vmem:[#allocation7 + $0xd0] sm:$0xff]
    %v717 = vld [vmem:[#allocation7 + $0xd8] sm:$0xff]
    %v718 = vld [vmem:[#allocation7 + $0xe0] sm:$0xff]
    %v719 = vld [vmem:[#allocation7 + $0xe8] sm:$0xff]
    %v720 = vld [vmem:[#allocation7 + $0xf0] sm:$0xff]
    %v721 = vld [vmem:[#allocation7 + $0xf8] sm:$0xff]
    %v722 = vld [vmem:[#allocation7 + $0x100] sm:$0xff]
    %v723 = vld [vmem:[#allocation7 + $0x108] sm:$0xff]
    %v724 = vld [vmem:[#allocation7 + $0x110] sm:$0xff]
    %v725 = vld [vmem:[#allocation7 + $0x118] sm:$0xff]
    %v726 = vld [vmem:[#allocation7 + $0x120] sm:$0xff]
    %v727 = vld [vmem:[#allocation7 + $0x128] sm:$0xff]
    %v728 = vld [vmem:[#allocation7 + $0x130] sm:$0xff]
    %v729 = vld [vmem:[#allocation7 + $0x138] sm:$0xff]
    %v730 = vld [vmem:[#allocation7 + $0x140] sm:$0xff]
    %v731 = vld [vmem:[#allocation7 + $0x148] sm:$0xff]
    %v732 = vld [vmem:[#allocation7 + $0x150] sm:$0xff]
    %v733 = vld [vmem:[#allocation7 + $0x158] sm:$0xff]
    %v734 = vld [vmem:[#allocation7 + $0x160] sm:$0xff]
    %v735 = vld [vmem:[#allocation7 + $0x168] sm:$0xff]
    %v736 = vld [vmem:[#allocation7 + $0x170] sm:$0xff]
    %v737 = vld [vmem:[#allocation7 + $0x178] sm:$0xff]
    %738 = vmatprep.subr.mxu0 0.0
    %739 = vmatpush1.msra.mxu0 %v705
    %740 = vmatprep.subr.mxu0 0.0
    %741 = vmatpush1.msra.mxu0 %v704
    %742 = vmatprep.subr.mxu0 0.0
    %743 = vmatpush1.msra.mxu0 %v703
    %744 = vmatprep.subr.mxu0 0.0
    %745 = vmatpush1.msra.mxu0 %v702
    %746 = vmatprep.subr.mxu0 0.0
    %747 = vmatpush1.msra.mxu0 %v701
    %748 = vmatprep.subr.mxu0 0.0
    %749 = vmatpush1.msra.mxu0 %v700
    %750 = vmatprep.subr.mxu0 0.0
    %751 = vmatpush1.msra.mxu0 %v699
    %752 = vmatprep.subr.mxu0 0.0
    %753 = vmatpush1.msra.mxu0 %v698
    %754 = vmatprep.subr.mxu0 0.0
    %755 = vmatpush1.msra.mxu0 %v697
    %756 = vmatprep.subr.mxu0 0.0
    %757 = vmatpush1.msra.mxu0 %v696
    %758 = vmatprep.subr.mxu0 0.0
    %759 = vmatpush1.msra.mxu0 %v695
    %760 = vmatprep.subr.mxu0 0.0
    %761 = vmatpush1.msra.mxu0 %v694
    %762 = vmatprep.subr.mxu0 0.0
    %763 = vmatpush1.msra.mxu0 %v693
    %764 = vmatprep.subr.mxu0 0.0
    %765 = vmatpush1.msra.mxu0 %v692
    %766 = vmatprep.subr.mxu0 0.0
    %767 = vmatpush1.msra.mxu0 %v691
    %768 = vmatprep.subr.mxu0 0.0
    %769 = vmatpush1.msra.mxu0 %v690
    %770 = vmatprep.subr.mxu0 0.0
    %771 = vmatpush2.msra.mxu0 %v721
    %772 = vmatprep.subr.mxu0 0.0
    %773 = vmatpush2.msra.mxu0 %v720
    %774 = vmatprep.subr.mxu0 0.0
    %775 = vmatpush2.msra.mxu0 %v719
    %776 = vmatprep.subr.mxu0 0.0
    %777 = vmatpush2.msra.mxu0 %v718
    %778 = vmatprep.subr.mxu0 0.0
    %779 = vmatpush2.msra.mxu0 %v717
    %780 = vmatprep.subr.mxu0 0.0
    %781 = vmatpush2.msra.mxu0 %v716
    %782 = vmatprep.subr.mxu0 0.0
    %783 = vmatpush2.msra.mxu0 %v715
    %784 = vmatprep.subr.mxu0 0.0
    %785 = vmatpush2.msra.mxu0 %v714
    %786 = vmatprep.subr.mxu0 0.0
    %787 = vmatpush2.msra.mxu0 %v713
    %788 = vmatprep.subr.mxu0 0.0
    %789 = vmatpush2.msra.mxu0 %v712
    %790 = vmatprep.subr.mxu0 0.0
    %791 = vmatpush2.msra.mxu0 %v711
    %792 = vmatprep.subr.mxu0 0.0
    %793 = vmatpush2.msra.mxu0 %v710
    %794 = vmatprep.subr.mxu0 0.0
    %795 = vmatpush2.msra.mxu0 %v709
    %796 = vmatprep.subr.mxu0 0.0
    %797 = vmatpush2.msra.mxu0 %v708
    %798 = vmatprep.subr.mxu0 0.0
    %799 = vmatpush2.msra.mxu0 %v707
    %800 = vmatprep.subr.mxu0 0.0
    %801 = vmatpush2.msra.mxu0 %v706
    %802 = vmatprep.mubr.f32.mxu0 %v483
    %803 = vmatmul.mubr.f32.gmra.mxu0 %v571
    %v804 = vpop.f32.mrf.mxu0
    %v805 = vadd.f32 0.0, %v804
    %v806 = vpop.f32.mrf.mxu0
    %807 = vmatprep.mubr.f32.mxu0 %v484
    %808 = vmatmul.mubr.f32.gmra.mxu0 %v576
    %v809 = vpop.f32.mrf.mxu0
    %v810 = vadd.f32 0.0, %v809
    %v811 = vpop.f32.mrf.mxu0
    %812 = vmatprep.mubr.f32.mxu0 %v485
    %813 = vmatmul.mubr.f32.gmra.mxu0 %v581
    %v814 = vpop.f32.mrf.mxu0
    %v815 = vadd.f32 0.0, %v814
    %v816 = vpop.f32.mrf.mxu0
    %817 = vmatprep.mubr.f32.mxu0 %v486
    %818 = vmatmul.mubr.f32.gmra.mxu0 %v586
    %v819 = vpop.f32.mrf.mxu0
    %v820 = vadd.f32 0.0, %v819
    %v821 = vpop.f32.mrf.mxu0
    %822 = vdwg.mxu0
    %823 = vmatprep.subr.mxu0 0.0
    %824 = vmatpush1.msra.mxu0 %v737
    %825 = vmatprep.subr.mxu0 0.0
    %826 = vmatpush1.msra.mxu0 %v736
    %827 = vmatprep.subr.mxu0 0.0
    %828 = vmatpush1.msra.mxu0 %v735
    %829 = vmatprep.subr.mxu0 0.0
    %830 = vmatpush1.msra.mxu0 %v734
    %831 = vmatprep.subr.mxu0 0.0
    %832 = vmatpush1.msra.mxu0 %v733
    %833 = vmatprep.subr.mxu0 0.0
    %834 = vmatpush1.msra.mxu0 %v732
    %835 = vmatprep.subr.mxu0 0.0
    %836 = vmatpush1.msra.mxu0 %v731
    %837 = vmatprep.subr.mxu0 0.0
    %838 = vmatpush1.msra.mxu0 %v730
    %839 = vmatprep.subr.mxu0 0.0
    %840 = vmatpush1.msra.mxu0 %v729
    %841 = vmatprep.subr.mxu0 0.0
    %842 = vmatpush1.msra.mxu0 %v728
    %843 = vmatprep.subr.mxu0 0.0
    %844 = vmatpush1.msra.mxu0 %v727
    %845 = vmatprep.subr.mxu0 0.0
    %846 = vmatpush1.msra.mxu0 %v726
    %847 = vmatprep.subr.mxu0 0.0
    %848 = vmatpush1.msra.mxu0 %v725
    %849 = vmatprep.subr.mxu0 0.0
    %850 = vmatpush1.msra.mxu0 %v724
    %851 = vmatprep.subr.mxu0 0.0
    %852 = vmatpush1.msra.mxu0 %v723
    %853 = vmatprep.subr.mxu0 0.0
    %854 = vmatpush1.msra.mxu0 %v722
    %855 = vmatprep.subr.mxu0 0.0
    %856 = vmatpush2.msra.mxu0 0.0
    %857 = vmatprep.subr.mxu0 0.0
    %858 = vmatpush2.msra.mxu0 0.0
    %859 = vmatprep.subr.mxu0 0.0
    %860 = vmatpush2.msra.mxu0 0.0
    %861 = vmatprep.subr.mxu0 0.0
    %862 = vmatpush2.msra.mxu0 0.0
    %863 = vmatprep.subr.mxu0 0.0
    %864 = vmatpush2.msra.mxu0 0.0
    %865 = vmatprep.subr.mxu0 0.0
    %866 = vmatpush2.msra.mxu0 0.0
    %867 = vmatprep.subr.mxu0 0.0
    %868 = vmatpush2.msra.mxu0 0.0
    %869 = vmatprep.subr.mxu0 0.0
    %870 = vmatpush2.msra.mxu0 0.0
    %871 = vmatprep.subr.mxu0 0.0
    %872 = vmatpush2.msra.mxu0 0.0
    %873 = vmatprep.subr.mxu0 0.0
    %874 = vmatpush2.msra.mxu0 0.0
    %875 = vmatprep.subr.mxu0 0.0
    %876 = vmatpush2.msra.mxu0 0.0
    %877 = vmatprep.subr.mxu0 0.0
    %878 = vmatpush2.msra.mxu0 0.0
    %879 = vmatprep.subr.mxu0 0.0
    %880 = vmatpush2.msra.mxu0 0.0
    %881 = vmatprep.subr.mxu0 0.0
    %882 = vmatpush2.msra.mxu0 0.0
    %883 = vmatprep.subr.mxu0 0.0
    %884 = vmatpush2.msra.mxu0 0.0
    %885 = vmatprep.subr.mxu0 0.0
    %886 = vmatpush2.msra.mxu0 0.0
    %887 = vmatprep.mubr.f32.mxu0 0.0
    %888 = vmatmul.mubr.f32.gmra.mxu0 %v672
    %v889 = vpop.f32.mrf.mxu0
    %v890 = vadd.f32 %v805, %v889
    %v891 = vpop.f32.mrf.mxu0
    %892 = vmatprep.mubr.f32.mxu0 0.0
    %893 = vmatmul.mubr.f32.gmra.mxu0 %v677
    %v894 = vpop.f32.mrf.mxu0
    %v895 = vadd.f32 %v810, %v894
    %v896 = vpop.f32.mrf.mxu0
    %897 = vmatprep.mubr.f32.mxu0 0.0
    %898 = vmatmul.mubr.f32.gmra.mxu0 %v682
    %v899 = vpop.f32.mrf.mxu0
    %v900 = vadd.f32 %v815, %v899
    %v901 = vpop.f32.mrf.mxu0
    %902 = vmatprep.mubr.f32.mxu0 0.0
    %903 = vmatmul.mubr.f32.gmra.mxu0 %v687
    %v904 = vpop.f32.mrf.mxu0
    %v905 = vadd.f32 %v820, %v904
    %v906 = vpop.f32.mrf.mxu0
    %907 = vdwg.mxu0
    %908 = vmatprep.subr.mxu0 0.0
    %909 = vmatpush1.msra.mxu0 %v263
    %910 = vmatprep.subr.mxu0 0.0
    %911 = vmatpush1.msra.mxu0 %v262
    %912 = vmatprep.subr.mxu0 0.0
    %913 = vmatpush1.msra.mxu0 %v261
    %914 = vmatprep.subr.mxu0 0.0
    %915 = vmatpush1.msra.mxu0 %v260
    %916 = vmatprep.subr.mxu0 0.0
    %917 = vmatpush1.msra.mxu0 %v259
    %918 = vmatprep.subr.mxu0 0.0
    %919 = vmatpush1.msra.mxu0 %v258
    %920 = vmatprep.subr.mxu0 0.0
    %921 = vmatpush1.msra.mxu0 %v257
    %922 = vmatprep.subr.mxu0 0.0
    %923 = vmatpush1.msra.mxu0 %v256
    %924 = vmatprep.subr.mxu0 0.0
    %925 = vmatpush1.msra.mxu0 %v255
    %926 = vmatprep.subr.mxu0 0.0
    %927 = vmatpush1.msra.mxu0 %v254
    %928 = vmatprep.subr.mxu0 0.0
    %929 = vmatpush1.msra.mxu0 %v253
    %930 = vmatprep.subr.mxu0 0.0
    %931 = vmatpush1.msra.mxu0 %v252
    %932 = vmatprep.subr.mxu0 0.0
    %933 = vmatpush1.msra.mxu0 %v251
    %934 = vmatprep.subr.mxu0 0.0
    %935 = vmatpush1.msra.mxu0 %v250
    %936 = vmatprep.subr.mxu0 0.0
    %937 = vmatpush1.msra.mxu0 %v249
    %938 = vmatprep.subr.mxu0 0.0
    %939 = vmatpush1.msra.mxu0 %v248
    %940 = vmatprep.subr.mxu0 0.0
    %941 = vmatpush2.msra.mxu0 0.0
    %942 = vmatprep.subr.mxu0 0.0
    %943 = vmatpush2.msra.mxu0 0.0
    %944 = vmatprep.subr.mxu0 0.0
    %945 = vmatpush2.msra.mxu0 0.0
    %946 = vmatprep.subr.mxu0 0.0
    %947 = vmatpush2.msra.mxu0 0.0
    %948 = vmatprep.subr.mxu0 0.0
    %949 = vmatpush2.msra.mxu0 0.0
    %950 = vmatprep.subr.mxu0 0.0
    %951 = vmatpush2.msra.mxu0 0.0
    %952 = vmatprep.subr.mxu0 0.0
    %953 = vmatpush2.msra.mxu0 0.0
    %954 = vmatprep.subr.mxu0 0.0
    %955 = vmatpush2.msra.mxu0 0.0
    %956 = vmatprep.subr.mxu0 0.0
    %957 = vmatpush2.msra.mxu0 0.0
    %958 = vmatprep.subr.mxu0 0.0
    %959 = vmatpush2.msra.mxu0 0.0
    %960 = vmatprep.subr.mxu0 0.0
    %961 = vmatpush2.msra.mxu0 0.0
    %962 = vmatprep.subr.mxu0 0.0
    %963 = vmatpush2.msra.mxu0 0.0
    %964 = vmatprep.subr.mxu0 0.0
    %965 = vmatpush2.msra.mxu0 0.0
    %966 = vmatprep.subr.mxu0 0.0
    %967 = vmatpush2.msra.mxu0 0.0
    %968 = vmatprep.subr.mxu0 0.0
    %969 = vmatpush2.msra.mxu0 0.0
    %970 = vmatprep.subr.mxu0 0.0
    %971 = vmatpush2.msra.mxu0 0.0
    %972 = vmatprep.mubr.f32.mxu0 0.0
    %973 = vmatmul.mubr.f32.gmra.mxu0 %v890
    %v974 = vpop.f32.mrf.mxu0
    %v975 = vadd.f32 0.0, %v974
    %v976 = vpop.f32.mrf.mxu0
    %977 = vmatprep.mubr.f32.mxu0 0.0
    %978 = vmatmul.mubr.f32.gmra.mxu0 %v895
    %v979 = vpop.f32.mrf.mxu0
    %v980 = vadd.f32 0.0, %v979
    %v981 = vpop.f32.mrf.mxu0
    %982 = vmatprep.mubr.f32.mxu0 0.0
    %983 = vmatmul.mubr.f32.gmra.mxu0 %v900
    %v984 = vpop.f32.mrf.mxu0
    %v985 = vadd.f32 0.0, %v984
    %v986 = vpop.f32.mrf.mxu0
    %987 = vmatprep.mubr.f32.mxu0 0.0
    %988 = vmatmul.mubr.f32.gmra.mxu0 %v905
    %v989 = vpop.f32.mrf.mxu0
    %v990 = vadd.f32 0.0, %v989
    %v991 = vpop.f32.mrf.mxu0
    %992 = vdwg.mxu0
    %v993 = vadd.f32 %v975, %v980
    %v994 = vadd.f32 %v993, %v985
    %v995 = vadd.f32 %v994, %v990
    %v996 = vrot.slane %v995, 4
    %v997 = vadd.f32 %v995, %v996
    %v998 = vrot.slane %v997, 2
    %v999 = vadd.f32 %v997, %v998
    %v1000 = vrot.slane %v999, 1
    %v1001 = vadd.f32 %v999, %v1000
    %v1002 = vmul.f32 %v890, %v890
    %v1003 = vmul.f32 %v895, %v895
    %v1004 = vmul.f32 %v900, %v900
    %v1005 = vmul.f32 %v905, %v905
    %1006 = vmatprep.subr.mxu0 0.0
    %1007 = vmatpush1.msra.mxu0 %v263
    %1008 = vmatprep.subr.mxu0 0.0
    %1009 = vmatpush1.msra.mxu0 %v262
    %1010 = vmatprep.subr.mxu0 0.0
    %1011 = vmatpush1.msra.mxu0 %v261
    %1012 = vmatprep.subr.mxu0 0.0
    %1013 = vmatpush1.msra.mxu0 %v260
    %1014 = vmatprep.subr.mxu0 0.0
    %1015 = vmatpush1.msra.mxu0 %v259
    %1016 = vmatprep.subr.mxu0 0.0
    %1017 = vmatpush1.msra.mxu0 %v258
    %1018 = vmatprep.subr.mxu0 0.0
    %1019 = vmatpush1.msra.mxu0 %v257
    %1020 = vmatprep.subr.mxu0 0.0
    %1021 = vmatpush1.msra.mxu0 %v256
    %1022 = vmatprep.subr.mxu0 0.0
    %1023 = vmatpush1.msra.mxu0 %v255
    %1024 = vmatprep.subr.mxu0 0.0
    %1025 = vmatpush1.msra.mxu0 %v254
    %1026 = vmatprep.subr.mxu0 0.0
    %1027 = vmatpush1.msra.mxu0 %v253
    %1028 = vmatprep.subr.mxu0 0.0
    %1029 = vmatpush1.msra.mxu0 %v252
    %1030 = vmatprep.subr.mxu0 0.0
    %1031 = vmatpush1.msra.mxu0 %v251
    %1032 = vmatprep.subr.mxu0 0.0
    %1033 = vmatpush1.msra.mxu0 %v250
    %1034 = vmatprep.subr.mxu0 0.0
    %1035 = vmatpush1.msra.mxu0 %v249
    %1036 = vmatprep.subr.mxu0 0.0
    %1037 = vmatpush1.msra.mxu0 %v248
    %1038 = vmatprep.subr.mxu0 0.0
    %1039 = vmatpush2.msra.mxu0 0.0
    %1040 = vmatprep.subr.mxu0 0.0
    %1041 = vmatpush2.msra.mxu0 0.0
    %1042 = vmatprep.subr.mxu0 0.0
    %1043 = vmatpush2.msra.mxu0 0.0
    %1044 = vmatprep.subr.mxu0 0.0
    %1045 = vmatpush2.msra.mxu0 0.0
    %1046 = vmatprep.subr.mxu0 0.0
    %1047 = vmatpush2.msra.mxu0 0.0
    %1048 = vmatprep.subr.mxu0 0.0
    %1049 = vmatpush2.msra.mxu0 0.0
    %1050 = vmatprep.subr.mxu0 0.0
    %1051 = vmatpush2.msra.mxu0 0.0
    %1052 = vmatprep.subr.mxu0 0.0
    %1053 = vmatpush2.msra.mxu0 0.0
    %1054 = vmatprep.subr.mxu0 0.0
    %1055 = vmatpush2.msra.mxu0 0.0
    %1056 = vmatprep.subr.mxu0 0.0
    %1057 = vmatpush2.msra.mxu0 0.0
    %1058 = vmatprep.subr.mxu0 0.0
    %1059 = vmatpush2.msra.mxu0 0.0
    %1060 = vmatprep.subr.mxu0 0.0
    %1061 = vmatpush2.msra.mxu0 0.0
    %1062 = vmatprep.subr.mxu0 0.0
    %1063 = vmatpush2.msra.mxu0 0.0
    %1064 = vmatprep.subr.mxu0 0.0
    %1065 = vmatpush2.msra.mxu0 0.0
    %1066 = vmatprep.subr.mxu0 0.0
    %1067 = vmatpush2.msra.mxu0 0.0
    %1068 = vmatprep.subr.mxu0 0.0
    %1069 = vmatpush2.msra.mxu0 0.0
    %1070 = vmatprep.mubr.f32.mxu0 0.0
    %1071 = vmatmul.mubr.f32.gmra.mxu0 %v1002
    %v1072 = vpop.f32.mrf.mxu0
    %v1073 = vadd.f32 0.0, %v1072
    %v1074 = vpop.f32.mrf.mxu0
    %1075 = vmatprep.mubr.f32.mxu0 0.0
    %1076 = vmatmul.mubr.f32.gmra.mxu0 %v1003
    %v1077 = vpop.f32.mrf.mxu0
    %v1078 = vadd.f32 0.0, %v1077
    %v1079 = vpop.f32.mrf.mxu0
    %1080 = vmatprep.mubr.f32.mxu0 0.0
    %1081 = vmatmul.mubr.f32.gmra.mxu0 %v1004
    %v1082 = vpop.f32.mrf.mxu0
    %v1083 = vadd.f32 0.0, %v1082
    %v1084 = vpop.f32.mrf.mxu0
    %1085 = vmatprep.mubr.f32.mxu0 0.0
    %1086 = vmatmul.mubr.f32.gmra.mxu0 %v1005
    %v1087 = vpop.f32.mrf.mxu0
    %v1088 = vadd.f32 0.0, %v1087
    %v1089 = vpop.f32.mrf.mxu0
    %1090 = vdwg.mxu0
    %v1091 = vadd.f32 %v1073, %v1078
    %v1092 = vadd.f32 %v1091, %v1083
    %v1093 = vadd.f32 %v1092, %v1088
    %v1094 = vrot.slane %v1093, 4
    %v1095 = vadd.f32 %v1093, %v1094
    %v1096 = vrot.slane %v1095, 2
    %v1097 = vadd.f32 %v1095, %v1096
    %v1098 = vrot.slane %v1097, 1
    %v1099 = vadd.f32 %v1097, %v1098
    %v1100 = vmul.f32 %v1001, %v1001
    %v1101 = vsub.f32 %v1099, %v1100
    %v1102 = vadd.f32 %v1101, 1e-05
    %v1103 = vrsqrt.pop %v1102
    %v1104 = vld [vmem:[%s8] sm:$0x1]
    %v1105 = vmul.f32 %v1103, %v1104
    %v1106 = vld [vmem:[%s9] sm:$0x1]
    %v1107 = vmul.f32 %v1001, %v1105
    %v1108 = vsub.f32 %v1106, %v1107
    %v1109 = vlaneseq
    %v1110 = vshrl.u32 %v1109, 7
    %v1111 = vsub.s32 0, %v1110
    %v1112 = vrot.slane %v1105, %v1111
    %v1113 = vmul.f32 %v890, %v1112
    %v1114 = vmul.f32 %v895, %v1112
    %v1115 = vmul.f32 %v900, %v1112
    %v1116 = vmul.f32 %v905, %v1112
    %v1118 = vlaneseq
    %v1119 = vshrl.u32 %v1118, 7
    %v1120 = vsub.s32 0, %v1119
    %v1121 = vrot.slane %v1108, %v1120
    %v1123 = vadd.f32 %v1113, %v1121
    %v1124 = vadd.f32 %v1114, %v1121
    %v1125 = vadd.f32 %v1115, %v1121
    %v1126 = vadd.f32 %v1116, %v1121
    %v1127 = vmax.f32 %v1123, 0.0
    %v1128 = vmax.f32 %v1124, 0.0
    %v1129 = vmax.f32 %v1125, 0.0
    %v1130 = vmax.f32 %v1126, 0.0
    %1131 = vst [vmem:[#allocation13] sm:$0xff] %v1127
    %1132 = vst [vmem:[#allocation13 + $0x8] sm:$0xff] %v1128
    %1133 = vst [vmem:[#allocation13 + $0x10] sm:$0xff] %v1129
    %1134 = vst [vmem:[#allocation13 + $0x18] sm:$0xff] %v1130
    // Predicated region
    $region66: #{tpu_custom_call.1} parent=1 // pred_check
      _
    $region67: #{tpu_custom_call.1} parent=1 // pred_check_branch
      %1136 = sbr.rel (0) target = $region69
    $region68: #{tpu_custom_call.1} parent=1 // pred_region
      %s1138 = ssub.s32 512, 512
      %1139 = vsyncadd [#allocation4], %s1138
      %s1140 = sshll.u32 [#allocation13], 4
      %s1141 = int_to_ptr.vmem [resolvable:$true] %s1140
      %1146 = dma.vmem_to_hbm [thread:$0]  %s1141, 512, %s10, [#allocation4], 128, 128, 8
    $region69: #{tpu_custom_call.1} parent=1 // pred_fallthru
      _
    // Predicated region
    $region70: #{tpu_custom_call.1} parent=1 // pred_check
      _
    $region71: #{tpu_custom_call.1} parent=1 // pred_check_branch
      %1148 = sbr.rel (0) target = $region73
    $region72: #{tpu_custom_call.1} parent=1 // pred_region
      %1149 = dma.done [#allocation4], 512
    $region73: #{tpu_custom_call.1} parent=1 // pred_fallthru
      _
    %1150 = vsyncpa [#allocation3], 1
    %1151 = vsyncpa [#allocation6], 1
    %1152 = vsyncpa [#allocation9], 1
    %1153 = vsyncpa [#allocation12], 1
    %1154 = vsyncpa [#allocation4], 1

</llo_original>
